<compile_context>
chip_gen: v7x
topology: tpu7x:2x2x1
jax: 0.10.0
libtpu: 0.0.40
codegen_flags: <defaults>
</compile_context>

<pallas_src>
import numpy as np
import jax
import jax.numpy as jnp
from jax.experimental import pallas as pl
from jax.experimental.pallas import tpu as pltpu

KERNEL_SIZES = (3, 4, 5)


def _round_up(a, m):
    return (a + m - 1) // m * m


def cnn_text_kernel(xcol_ref, wconv_ref, bconv_ref, mask_ref, wfc_ref, bfc_ref, o_ref):
    # xcol_ref:  (TB, Lcp, KD)  bf16  im2col'd embeddings, KD = KMAX*D
    # wconv_ref: (KD, NF3)      bf16  fused conv weight (zeros at shifts >= k per group)
    # bconv_ref: (1, NF3)       f32   concatenated conv biases (kernel-size-major)
    # mask_ref:  (Lcp, NF3)     f32   0 where the time step is valid for that group, -1e30 otherwise
    # wfc_ref:   (NF3, CP)      bf16  FC weight, rows permuted to kernel-size-major,
    #                                 columns zero-padded to CP (lane-dense output)
    # bfc_ref:   (1, CP)        f32
    # o_ref:     (TB, CP)       f32
    TB, Lcp, KD = xcol_ref.shape
    NF3 = wconv_ref.shape[1]

    # One fat bf16 MXU matmul (contraction K = KMAX*D) covers all three conv banks.
    xcol = xcol_ref[...].reshape(TB * Lcp, KD)
    acc = jnp.dot(xcol, wconv_ref[...], preferred_element_type=jnp.float32)  # (TB*Lcp, NF3)
    acc = acc.reshape(TB, Lcp, NF3)

    # Single full-tile masked max over time; the mask excludes each kernel-size group's
    # invalid (zero-padded) trailing time steps.  Bias + ReLU AFTER the max is valid only
    # because the bias is time-invariant and ReLU is monotone -- keep it that way.
    feat = jnp.max(acc + mask_ref[...][None, :, :], axis=1)                  # (TB, NF3)
    feat = jnp.maximum(feat + bconv_ref[...], 0.0)
    # TODO(synk): nn.Dropout(p=0.5) is identity at inference; training-mode dropout omitted.
    o_ref[...] = (jnp.dot(feat.astype(jnp.bfloat16), wfc_ref[...],
                          preferred_element_type=jnp.float32) + bfc_ref[...])


def dynamic_cnn_text_forward(emb, conv_ws, conv_bs, wfc_torch, bfc, *, block_b=None):
    """emb: (B, L, D) float embeddings (gather done in plain JAX glue).
    conv_ws[i]: (k_i, D, F); conv_bs[i]: (F,);
    wfc_torch: (C, nK*F) torch fc.weight (acts on f-major features); bfc: (C,)."""
    B, L, D = emb.shape
    nK = len(KERNEL_SIZES)
    KMIN, KMAX = min(KERNEL_SIZES), max(KERNEL_SIZES)
    F = conv_ws[0].shape[-1]
    C = wfc_torch.shape[0]
    NF3 = nK * F
    KD = KMAX * D
    assert L >= KMAX, "sentence length must be >= max(kernel_sizes)"

    # ---- pack parameters (once per call, plain XLA) ----
    # Fused conv weight: group g holds W_{k_g}[j] at shift j < k_g, zeros otherwise.
    wcol = jnp.zeros((KMAX, D, NF3), jnp.float32)
    for g, (k, w) in enumerate(zip(KERNEL_SIZES, conv_ws)):
        wcol = wcol.at[:k, :, g * F:(g + 1) * F].set(w.astype(jnp.float32))
    wcol = wcol.reshape(KD, NF3).astype(jnp.bfloat16)           # row index = j*D + d
    bconv = jnp.concatenate([b.astype(jnp.float32) for b in conv_bs]).reshape(1, NF3)

    # FC weight: torch layout acts on f-major features (index f*nK + g); the kernel produces
    # kernel-size-major features (index g*F + f) -> permute rows; pad classes to lane width.
    perm = (jnp.arange(F)[None, :] * nK + jnp.arange(nK)[:, None]).reshape(-1)   # (nK*F,)
    wfc = wfc_torch.astype(jnp.float32).T[perm]                                  # (nK*F, C)
    CP = _round_up(C, 128)
    wfc = jnp.pad(wfc, ((0, 0), (0, CP - C))).astype(jnp.bfloat16)
    bfc_p = jnp.pad(bfc.astype(jnp.float32), (0, CP - C)).reshape(1, CP)

    # ---- pooling mask (0 where valid, -1e30 where the time step is out of range) ----
    Lcp = _round_up(L - KMIN + 1, 16)       # conv rows per sentence, sublane-tile aligned
    Lpad = Lcp + KMAX - 1                   # padded sentence length for im2col windows
    mask_np = np.zeros((Lcp, NF3), np.float32)
    for g, k in enumerate(KERNEL_SIZES):
        lout = L - k + 1
        assert lout <= Lcp, "pooling range must fit inside the padded conv rows"
        mask_np[lout:, g * F:(g + 1) * F] = -1e30
    mask = jnp.asarray(mask_np)

    # ---- block size heuristic + VMEM budget ----
    if block_b is None:
        block_b = 256                                            # tunable, multiple of 8
    # v7x megacore: keep >= 2 parallel grid steps whenever the batch allows it.
    block_b = min(block_b, _round_up(max(pl.cdiv(B, 2), 8), 8))
    block_b = max(8, _round_up(block_b, 8))

    def vmem_estimate(tb):
        return (2 * tb * Lcp * KD * 2              # double-buffered bf16 im2col blocks
                + tb * Lcp * NF3 * 4               # live f32 conv activations
                + 2 * tb * CP * 4                  # double-buffered f32 output blocks
                + KD * NF3 * 2 + NF3 * CP * 2      # resident bf16 weights
                + Lcp * NF3 * 4 + (NF3 + CP) * 4)  # mask + biases

    VMEM_BUDGET = 40 << 20        # leave headroom under v7x's 64 MiB physical VMEM
    while block_b > 8 and vmem_estimate(block_b) > VMEM_BUDGET:
        block_b = max(8, _round_up(block_b // 2, 8))
    BP = _round_up(B, block_b)
    vmem_limit = int(min(48 << 20, max(32 << 20, 2 * vmem_estimate(block_b))))

    # ---- im2col activations, bf16 (halves DMA vs f32 embeddings) ----
    x = jnp.pad(emb.astype(jnp.bfloat16), ((0, BP - B), (0, Lpad - L), (0, 0)))  # (BP, Lpad, D)
    xcol = jnp.stack([x[:, j:j + Lcp, :] for j in range(KMAX)], axis=2)          # (BP, Lcp, KMAX, D)
    xcol = xcol.reshape(BP, Lcp, KD)                                             # col index = j*D + d

    out = pl.pallas_call(
        cnn_text_kernel,
        out_shape=jax.ShapeDtypeStruct((BP, CP), jnp.float32),
        grid_spec=pltpu.PrefetchScalarGridSpec(
            num_scalar_prefetch=0,
            grid=(BP // block_b,),
            in_specs=[
                pl.BlockSpec((block_b, Lcp, KD), lambda b: (b, 0, 0)),
                pl.BlockSpec((KD, NF3), lambda b: (0, 0)),
                pl.BlockSpec((1, NF3), lambda b: (0, 0)),
                pl.BlockSpec((Lcp, NF3), lambda b: (0, 0)),
                pl.BlockSpec((NF3, CP), lambda b: (0, 0)),
                pl.BlockSpec((1, CP), lambda b: (0, 0)),
            ],
            out_specs=pl.BlockSpec((block_b, CP), lambda b: (b, 0)),
        ),
        compiler_params=pltpu.CompilerParams(
            dimension_semantics=("parallel",),
            vmem_limit_bytes=vmem_limit),
    )(xcol, wcol, bconv, mask, wfc, bfc_p)
    return out[:B, :C]


def reference_forward(emb, conv_ws, conv_bs, wfc_torch, bfc):
    """Pure-JAX reference mirroring torch's DynamicCNNText.forward (inference),
    using the same MXU dtypes as the kernel (bf16 operands, f32 accumulation)."""
    B, L, _ = emb.shape
    x = emb.astype(jnp.bfloat16)
    per_k = []
    for k, w, bv in zip(KERNEL_SIZES, conv_ws, conv_bs):
        lout = L - k + 1
        wb = w.astype(jnp.bfloat16)
        acc = jnp.zeros((B, lout, w.shape[-1]), jnp.float32)
        for j in range(k):
            acc = acc + jnp.einsum('bld,df->blf', x[:, j:j + lout, :], wb[j],
                                   preferred_element_type=jnp.float32)
        acc = jax.nn.relu(acc + bv[None, None, :])       # conv bias + ReLU
        per_k.append(jnp.max(acc, axis=1))               # max-pool over time -> (B, F)
    # torch: cat([(B,F,1)]*nK, dim=2).view(B, -1) -> feature index = f*nK + kidx
    feat = jnp.stack(per_k, axis=-1).reshape(B, -1)
    logits = jnp.dot(feat.astype(jnp.bfloat16), wfc_torch.T.astype(jnp.bfloat16),
                     preferred_element_type=jnp.float32)
    return logits + bfc[None, :].astype(jnp.float32)


if __name__ == "__main__":
    # Small, deterministic configuration consistent with the module.
    VOCAB_SIZE = 50
    PAD_IDX = 0
    EMBED_DIM = 32           # word_embedding_dim
    NUM_FILTERS = 128        # num_filters (lane-aligned)
    NUM_CLASSES = 8          # len(targetset)
    BATCH = 6
    SEQ_LEN = 16

    key = jax.random.PRNGKey(0)
    keys = jax.random.split(key, 16)

    # Embedding table (padding_idx row zeroed, matching nn.Embedding(padding_idx=...)).
    emb_table = 0.1 * jax.random.normal(keys[0], (VOCAB_SIZE, EMBED_DIM), jnp.float32)
    emb_table = emb_table.at[PAD_IDX].set(0.0)

    # Conv1d weights: torch shape (F, D, k); kernel/reference use (k, D, F).
    conv_ws, conv_bs = [], []
    for i, k in enumerate(KERNEL_SIZES):
        w_torch = 0.1 * jax.random.normal(keys[1 + i], (NUM_FILTERS, EMBED_DIM, k), jnp.float32)
        b = 0.1 * jax.random.normal(keys[4 + i], (NUM_FILTERS,), jnp.float32)
        conv_ws.append(jnp.transpose(w_torch, (2, 1, 0)))       # (k, D, F)
        conv_bs.append(b)

    # FC: torch weight (C, nK*F) acting on torch-ordered features (index f*nK + kidx).
    wfc_torch = 0.1 * jax.random.normal(
        keys[8], (NUM_CLASSES, NUM_FILTERS * len(KERNEL_SIZES)), jnp.float32)
    bfc = 0.1 * jax.random.normal(keys[9], (NUM_CLASSES,), jnp.float32)

    # Input token ids and embedding lookup (gather) in plain JAX glue.
    sents = jax.random.randint(keys[10], (BATCH, SEQ_LEN), 0, VOCAB_SIZE, jnp.int32)
    emb = emb_table[sents]                                      # (B, L, D)

    out = dynamic_cnn_text_forward(emb, conv_ws, conv_bs, wfc_torch, bfc)
    out = jax.block_until_ready(out)

    ref = reference_forward(emb, conv_ws, conv_bs, wfc_torch, bfc)
    # bf16 operands on both sides; remaining diffs are f32 accumulation-order noise plus
    # (rarely) a single-ulp bf16 rounding flip of one pooled feature.
    np.testing.assert_allclose(np.asarray(out), np.asarray(ref), rtol=5e-4, atol=5e-4)

    print("KERNEL_OK")
</pallas_src>

<mosaic_0001>
module attributes {stable_mosaic.version = 11 : i64} {
  func.func @cnn_text_kernel(%arg0: i32, %arg1: memref<8x16x160xbf16, #tpu.memory_space<vmem>>, %arg2: memref<160x384xbf16, #tpu.memory_space<vmem>>, %arg3: memref<1x384xf32, #tpu.memory_space<vmem>>, %arg4: memref<16x384xf32, #tpu.memory_space<vmem>>, %arg5: memref<384x128xbf16, #tpu.memory_space<vmem>>, %arg6: memref<1x128xf32, #tpu.memory_space<vmem>>, %arg7: memref<8x128xf32, #tpu.memory_space<vmem>>) attributes {dimension_semantics = [#tpu.dimension_semantics<parallel>], iteration_bounds = array<i64: 1>, scalar_prefetch = 0 : i64, scratch_operands = 0 : i64, tpu.core_type = #tpu.core_type<tc>, window_params = [{transform_indices = @transform_0, window_bounds = array<i64: 8, 16, 160>}, {pipeline_mode = #tpu.pipeline_mode<synchronous>, transform_indices = @transform_1, window_bounds = array<i64: 160, 384>}, {pipeline_mode = #tpu.pipeline_mode<synchronous>, transform_indices = @transform_2, window_bounds = array<i64: 1, 384>}, {pipeline_mode = #tpu.pipeline_mode<synchronous>, transform_indices = @transform_3, window_bounds = array<i64: 16, 384>}, {pipeline_mode = #tpu.pipeline_mode<synchronous>, transform_indices = @transform_4, window_bounds = array<i64: 384, 128>}, {pipeline_mode = #tpu.pipeline_mode<synchronous>, transform_indices = @transform_5, window_bounds = array<i64: 1, 128>}, {transform_indices = @transform_6, window_bounds = array<i64: 8, 128>}]} {
    %c0 = arith.constant 0 : index
    %c0_0 = arith.constant 0 : index
    %c0_1 = arith.constant 0 : index
    %0 = vector.load %arg1[%c0, %c0_0, %c0_1] : memref<8x16x160xbf16, #tpu.memory_space<vmem>>, vector<8x16x160xbf16>
    %1 = vector.shape_cast %0 : vector<8x16x160xbf16> to vector<128x160xbf16>
    %c0_2 = arith.constant 0 : index
    %c0_3 = arith.constant 0 : index
    %2 = vector.load %arg2[%c0_2, %c0_3] : memref<160x384xbf16, #tpu.memory_space<vmem>>, vector<160x384xbf16>
    %cst = arith.constant dense<0.000000e+00> : vector<128x384xf32>
    %3 = tpu.matmul %1, %2, %cst {dimension_numbers = #tpu.dot_dimension_numbers<[1], [0], [0], [1], [0, 0, 1, 1], [], []>} : vector<128x160xbf16>, vector<160x384xbf16>, vector<128x384xf32> -> vector<128x384xf32>
    %4 = vector.shape_cast %3 : vector<128x384xf32> to vector<8x16x384xf32>
    %c0_4 = arith.constant 0 : index
    %c0_5 = arith.constant 0 : index
    %5 = vector.load %arg4[%c0_4, %c0_5] : memref<16x384xf32, #tpu.memory_space<vmem>>, vector<16x384xf32>
    %6 = vector.shape_cast %5 : vector<16x384xf32> to vector<1x16x384xf32>
    %7 = vector.broadcast %6 : vector<1x16x384xf32> to vector<8x16x384xf32>
    %8 = arith.addf %4, %7 : vector<8x16x384xf32>
    %cst_6 = arith.constant dense<0xFF800000> : vector<8x384xf32>
    %9 = vector.multi_reduction <maximumf>, %8, %cst_6 [1] : vector<8x16x384xf32> to vector<8x384xf32>
    %c0_7 = arith.constant 0 : index
    %c0_8 = arith.constant 0 : index
    %10 = vector.load %arg3[%c0_7, %c0_8] : memref<1x384xf32, #tpu.memory_space<vmem>>, vector<1x384xf32>
    %11 = vector.broadcast %10 : vector<1x384xf32> to vector<8x384xf32>
    %12 = arith.addf %9, %11 : vector<8x384xf32>
    %cst_9 = arith.constant 0.000000e+00 : f32
    %13 = vector.broadcast %cst_9 : f32 to vector<8x384xf32>
    %14 = arith.maximumf %12, %13 : vector<8x384xf32>
    %15 = arith.truncf %14 : vector<8x384xf32> to vector<8x384xbf16>
    %c0_10 = arith.constant 0 : index
    %c0_11 = arith.constant 0 : index
    %16 = vector.load %arg5[%c0_10, %c0_11] : memref<384x128xbf16, #tpu.memory_space<vmem>>, vector<384x128xbf16>
    %cst_12 = arith.constant dense<0.000000e+00> : vector<8x128xf32>
    %17 = tpu.matmul %15, %16, %cst_12 {dimension_numbers = #tpu.dot_dimension_numbers<[1], [0], [0], [1], [0, 0, 1, 1], [], []>} : vector<8x384xbf16>, vector<384x128xbf16>, vector<8x128xf32> -> vector<8x128xf32>
    %c0_13 = arith.constant 0 : index
    %c0_14 = arith.constant 0 : index
    %18 = vector.load %arg6[%c0_13, %c0_14] : memref<1x128xf32, #tpu.memory_space<vmem>>, vector<1x128xf32>
    %19 = vector.broadcast %18 : vector<1x128xf32> to vector<8x128xf32>
    %20 = arith.addf %17, %19 : vector<8x128xf32>
    %c0_15 = arith.constant 0 : index
    %c0_16 = arith.constant 0 : index
    %21 = vector.load %arg7[%c0_15, %c0_16] : memref<8x128xf32, #tpu.memory_space<vmem>>, vector<8x128xf32>
    tpu.vector_store %arg7[%c0_15, %c0_16], %20 {strides = array<i32>} : memref<8x128xf32, #tpu.memory_space<vmem>>, vector<8x128xf32>,
    return
  }
  func.func @transform_0(%arg0: i32) -> (i32, i32, i32) {
    %c0_i32 = arith.constant 0 : i32
    %c0_i32_0 = arith.constant 0 : i32
    %c0_i32_1 = arith.constant 0 : i32
    return %arg0, %c0_i32, %c0_i32_0 : i32, i32, i32
  }
  func.func @transform_1(%arg0: i32) -> (i32, i32) {
    %c0_i32 = arith.constant 0 : i32
    %c0_i32_0 = arith.constant 0 : i32
    %c0_i32_1 = arith.constant 0 : i32
    return %c0_i32, %c0_i32_0 : i32, i32
  }
  func.func @transform_2(%arg0: i32) -> (i32, i32) {
    %c0_i32 = arith.constant 0 : i32
    %c0_i32_0 = arith.constant 0 : i32
    %c0_i32_1 = arith.constant 0 : i32
    return %c0_i32, %c0_i32_0 : i32, i32
  }
  func.func @transform_3(%arg0: i32) -> (i32, i32) {
    %c0_i32 = arith.constant 0 : i32
    %c0_i32_0 = arith.constant 0 : i32
    %c0_i32_1 = arith.constant 0 : i32
    return %c0_i32, %c0_i32_0 : i32, i32
  }
  func.func @transform_4(%arg0: i32) -> (i32, i32) {
    %c0_i32 = arith.constant 0 : i32
    %c0_i32_0 = arith.constant 0 : i32
    %c0_i32_1 = arith.constant 0 : i32
    return %c0_i32, %c0_i32_0 : i32, i32
  }
  func.func @transform_5(%arg0: i32) -> (i32, i32) {
    %c0_i32 = arith.constant 0 : i32
    %c0_i32_0 = arith.constant 0 : i32
    %c0_i32_1 = arith.constant 0 : i32
    return %c0_i32, %c0_i32_0 : i32, i32
  }
  func.func @transform_6(%arg0: i32) -> (i32, i32) {
    %c0_i32 = arith.constant 0 : i32
    %c0_i32_0 = arith.constant 0 : i32
    return %arg0, %c0_i32 : i32, i32
  }
}

</mosaic_0001>

<llo_original>
// kernel: tpu_custom_call.1
$region0: #{tpu_custom_call.1}
  #allocation0 [shape = 'u32[]', space=smem, size = 0x4, offset = 0x4, fixed_abs, tag = 'smem constant byte address 0x4 - core index']
  #allocation1 [shape = 'u32[144,128]{1,0:T(1,128)}', space=vmem, size = 0x12000, scoped, tag = 'internal scratch']
  %s0 = inlined_call_operand.hbm [shape: bf16[8,16,160], index: 0, kind: input, shape index: {}]
  %s1 = inlined_call_operand.hbm [shape: bf16[160,384], index: 1, kind: input, shape index: {}]
  %s2 = inlined_call_operand.vmem [shape: f32[1,384], index: 2, kind: input, shape index: {}]
  %s3 = inlined_call_operand.hbm [shape: f32[16,384], index: 3, kind: input, shape index: {}]
  %s4 = inlined_call_operand.hbm [shape: bf16[384,128], index: 4, kind: input, shape index: {}]
  %s5 = inlined_call_operand.vmem [shape: f32[1,128], index: 5, kind: input, shape index: {}]
  %s6 = inlined_call_operand.hbm [shape: f32[8,128], index: 6, kind: output, shape index: {}]
  %s7 = sld [smem:[#allocation0]]
  $region50: #{tpu_custom_call.1} parent=0
    _
  %s9 = ssub.s32 1, %s7
  %s10 = scalar_select 0, %s9, %s7
  $region1: #{tpu_custom_call.1} parent=0
    #allocation2 [shape = 'u8[65536]{0}', space=vmem, size = 0x10000, scoped, tag = 'input window, operand 0, single buffered']
    #allocation3 [shape = 's32[1]{0}', space=sflag, size = 0x4, scoped, tag = 'scoped memory for tpu_custom_call.1']
    #allocation4 [shape = 's32[1]{0}', space=sflag, size = 0x4, scoped, tag = 'scoped memory for tpu_custom_call.1']
    #allocation5 [shape = 'u8[122880]{0}', space=vmem, size = 0x1e000, scoped, tag = 'input window, operand 1, single buffered']
    #allocation6 [shape = 's32[1]{0}', space=sflag, size = 0x4, scoped, tag = 'scoped memory for tpu_custom_call.1']
    #allocation7 [shape = 'u8[24576]{0}', space=vmem, size = 0x6000, scoped, tag = 'input window, operand 3, single buffered']
    #allocation8 [shape = 'u8[98304]{0}', space=vmem, size = 0x18000, scoped, tag = 'input window, operand 4, single buffered']
    #allocation9 [shape = 's32[1]{0}', space=sflag, size = 0x4, scoped, tag = 'scoped memory for tpu_custom_call.1']
    #allocation10 [shape = 'u8[4096]{0}', space=vmem, size = 0x1000, scoped, tag = 'output window, operand 0, single buffered']
    %11 = vsyncpa [#allocation3], 0
    %12 = vsyncpa [#allocation6], 0
    %13 = vsyncpa [#allocation9], 0
    %14 = vsyncpa [#allocation4], 0
    // Predicated region
    $region2: #{tpu_custom_call.1} parent=1 // pred_check
      _
    $region3: #{tpu_custom_call.1} parent=1 // pred_check_branch
      %16 = sbr.rel (0) target = $region5
    $region4: #{tpu_custom_call.1} parent=1 // pred_region
      %s18 = ssub.s32 2048, 2048
      %19 = vsyncadd [#allocation3], %s18
      %s20 = sshll.u32 [#allocation2], 4
      %s21 = int_to_ptr.vmem [resolvable:$true] %s20
      %26 = dma.hbm_to_vmem [thread:$0]  %s0, 2048, %s21, [#allocation3], 128, 128, 8
    $region5: #{tpu_custom_call.1} parent=1 // pred_fallthru
      _
    // Predicated region
    $region6: #{tpu_custom_call.1} parent=1 // pred_check
      _
    $region7: #{tpu_custom_call.1} parent=1 // pred_check_branch
      %28 = sbr.rel (0) target = $region9
    $region8: #{tpu_custom_call.1} parent=1 // pred_region
      %s30 = ssub.s32 3840, 3840
      %31 = vsyncadd [#allocation6], %s30
      %s32 = sshll.u32 [#allocation5], 4
      %s33 = int_to_ptr.vmem [resolvable:$true] %s32
      %38 = dma.hbm_to_vmem [thread:$0]  %s1, 3840, %s33, [#allocation6], 192, 192, 12
    $region9: #{tpu_custom_call.1} parent=1 // pred_fallthru
      _
    // Predicated region
    $region10: #{tpu_custom_call.1} parent=1 // pred_check
      _
    $region11: #{tpu_custom_call.1} parent=1 // pred_check_branch
      %40 = sbr.rel (0) target = $region13
    $region12: #{tpu_custom_call.1} parent=1 // pred_region
      _
    $region13: #{tpu_custom_call.1} parent=1 // pred_fallthru
      _
    // Predicated region
    $region14: #{tpu_custom_call.1} parent=1 // pred_check
      _
    $region15: #{tpu_custom_call.1} parent=1 // pred_check_branch
      %42 = sbr.rel (0) target = $region17
    $region16: #{tpu_custom_call.1} parent=1 // pred_region
      %s44 = ssub.s32 768, 768
      %45 = vsyncadd [#allocation6], %s44
      %s46 = sshll.u32 [#allocation7], 4
      %s47 = int_to_ptr.vmem [resolvable:$true] %s46
      %52 = dma.hbm_to_vmem [thread:$0]  %s3, 768, %s47, [#allocation6], 384, 384, 24
    $region17: #{tpu_custom_call.1} parent=1 // pred_fallthru
      _
    // Predicated region
    $region18: #{tpu_custom_call.1} parent=1 // pred_check
      _
    $region19: #{tpu_custom_call.1} parent=1 // pred_check_branch
      %54 = sbr.rel (0) target = $region21
    $region20: #{tpu_custom_call.1} parent=1 // pred_region
      %s56 = ssub.s32 3072, 3072
      %57 = vsyncadd [#allocation9], %s56
      %s58 = sshll.u32 [#allocation8], 4
      %s59 = int_to_ptr.vmem [resolvable:$true] %s58
      %64 = dma.hbm_to_vmem [thread:$0]  %s4, 3072, %s59, [#allocation9], 64, 64, 4
    $region21: #{tpu_custom_call.1} parent=1 // pred_fallthru
      _
    // Predicated region
    $region22: #{tpu_custom_call.1} parent=1 // pred_check
      _
    $region23: #{tpu_custom_call.1} parent=1 // pred_check_branch
      %66 = sbr.rel (0) target = $region25
    $region24: #{tpu_custom_call.1} parent=1 // pred_region
      _
    $region25: #{tpu_custom_call.1} parent=1 // pred_fallthru
      _
    // Predicated region
    $region26: #{tpu_custom_call.1} parent=1 // pred_check
      _
    $region27: #{tpu_custom_call.1} parent=1 // pred_check_branch
      %68 = sbr.rel (0) target = $region29
    $region28: #{tpu_custom_call.1} parent=1 // pred_region
      %69 = dma.done [#allocation3], 2048
    $region29: #{tpu_custom_call.1} parent=1 // pred_fallthru
      _
    // Predicated region
    $region30: #{tpu_custom_call.1} parent=1 // pred_check
      _
    $region31: #{tpu_custom_call.1} parent=1 // pred_check_branch
      %71 = sbr.rel (0) target = $region33
    $region32: #{tpu_custom_call.1} parent=1 // pred_region
      %72 = dma.done [#allocation6], 3840
    $region33: #{tpu_custom_call.1} parent=1 // pred_fallthru
      _
    // Predicated region
    $region34: #{tpu_custom_call.1} parent=1 // pred_check
      _
    $region35: #{tpu_custom_call.1} parent=1 // pred_check_branch
      %74 = sbr.rel (0) target = $region37
    $region36: #{tpu_custom_call.1} parent=1 // pred_region
      %75 = dma.done [#allocation6], 768
    $region37: #{tpu_custom_call.1} parent=1 // pred_fallthru
      _
    // Predicated region
    $region38: #{tpu_custom_call.1} parent=1 // pred_check
      _
    $region39: #{tpu_custom_call.1} parent=1 // pred_check_branch
      %77 = sbr.rel (0) target = $region41
    $region40: #{tpu_custom_call.1} parent=1 // pred_region
      %78 = dma.done [#allocation9], 3072
    $region41: #{tpu_custom_call.1} parent=1 // pred_fallthru
      _
    %v80 = vld [vmem:[#allocation2] sm:$0xff]
    %v81 = vld [vmem:[#allocation2 + $0x8] sm:$0xff]
    %v82 = vld [vmem:[#allocation2 + $0x10] sm:$0xff]
    %v83 = vld [vmem:[#allocation2 + $0x18] sm:$0xff]
    %v84 = vld [vmem:[#allocation2 + $0x20] sm:$0xff]
    %v85 = vld [vmem:[#allocation2 + $0x28] sm:$0xff]
    %v86 = vld [vmem:[#allocation2 + $0x30] sm:$0xff]
    %v87 = vld [vmem:[#allocation2 + $0x38] sm:$0xff]
    %v88 = vld [vmem:[#allocation2 + $0x40] sm:$0xff]
    %v89 = vld [vmem:[#allocation2 + $0x48] sm:$0xff]
    %v90 = vld [vmem:[#allocation2 + $0x50] sm:$0xff]
    %v91 = vld [vmem:[#allocation2 + $0x58] sm:$0xff]
    %v92 = vld [vmem:[#allocation2 + $0x60] sm:$0xff]
    %v93 = vld [vmem:[#allocation2 + $0x68] sm:$0xff]
    %v94 = vld [vmem:[#allocation2 + $0x70] sm:$0xff]
    %v95 = vld [vmem:[#allocation2 + $0x78] sm:$0xff]
    %v96 = vld [vmem:[#allocation5] sm:$0xff]
    %v97 = vld [vmem:[#allocation5 + $0x8] sm:$0xf]
    %v98 = vld [vmem:[#allocation5 + $0xc] sm:$0xff]
    %v99 = vld [vmem:[#allocation5 + $0x14] sm:$0xf]
    %v100 = vld [vmem:[#allocation5 + $0x18] sm:$0xff]
    %v101 = vld [vmem:[#allocation5 + $0x20] sm:$0xf]
    %v102 = vld [vmem:[#allocation5 + $0x24] sm:$0xff]
    %v103 = vld [vmem:[#allocation5 + $0x2c] sm:$0xf]
    %v104 = vld [vmem:[#allocation5 + $0x30] sm:$0xff]
    %v105 = vld [vmem:[#allocation5 + $0x38] sm:$0xf]
    %v106 = vld [vmem:[#allocation5 + $0x3c] sm:$0xff]
    %v107 = vld [vmem:[#allocation5 + $0x44] sm:$0xf]
    %v108 = vld [vmem:[#allocation5 + $0x48] sm:$0xff]
    %v109 = vld [vmem:[#allocation5 + $0x50] sm:$0xf]
    %v110 = vld [vmem:[#allocation5 + $0x54] sm:$0xff]
    %v111 = vld [vmem:[#allocation5 + $0x5c] sm:$0xf]
    %v112 = vld [vmem:[#allocation5 + $0x60] sm:$0xff]
    %v113 = vld [vmem:[#allocation5 + $0x68] sm:$0xf]
    %v114 = vld [vmem:[#allocation5 + $0x6c] sm:$0xff]
    %v115 = vld [vmem:[#allocation5 + $0x74] sm:$0xf]
    %v116 = vld [vmem:[#allocation5 + $0x78] sm:$0xff]
    %v117 = vld [vmem:[#allocation5 + $0x80] sm:$0xf]
    %v118 = vld [vmem:[#allocation5 + $0x84] sm:$0xff]
    %v119 = vld [vmem:[#allocation5 + $0x8c] sm:$0xf]
    %v120 = vld [vmem:[#allocation5 + $0x90] sm:$0xff]
    %v121 = vld [vmem:[#allocation5 + $0x98] sm:$0xf]
    %v122 = vld [vmem:[#allocation5 + $0x9c] sm:$0xff]
    %v123 = vld [vmem:[#allocation5 + $0xa4] sm:$0xf]
    %v124 = vld [vmem:[#allocation5 + $0xa8] sm:$0xff]
    %v125 = vld [vmem:[#allocation5 + $0xb0] sm:$0xf]
    %v126 = vld [vmem:[#allocation5 + $0xb4] sm:$0xff]
    %v127 = vld [vmem:[#allocation5 + $0xbc] sm:$0xf]
    %v128 = vld [vmem:[#allocation5 + $0xc0] sm:$0xff]
    %v129 = vld [vmem:[#allocation5 + $0xc8] sm:$0xf]
    %v130 = vld [vmem:[#allocation5 + $0xcc] sm:$0xff]
    %v131 = vld [vmem:[#allocation5 + $0xd4] sm:$0xf]
    %v132 = vld [vmem:[#allocation5 + $0xd8] sm:$0xff]
    %v133 = vld [vmem:[#allocation5 + $0xe0] sm:$0xf]
    %v134 = vld [vmem:[#allocation5 + $0xe4] sm:$0xff]
    %v135 = vld [vmem:[#allocation5 + $0xec] sm:$0xf]
    %v152 = vunpack.c.l.b16 %v80
    %v153 = vunpack.c.h.b16 %v80
    %v154 = vunpack.c.l.b16 %v81
    %v155 = vunpack.c.h.b16 %v81
    %v156 = vunpack.c.l.b16 %v82
    %v157 = vunpack.c.h.b16 %v82
    %v158 = vunpack.c.l.b16 %v83
    %v159 = vunpack.c.h.b16 %v83
    %v160 = vunpack.c.l.b16 %v84
    %v161 = vunpack.c.h.b16 %v84
    %v162 = vunpack.c.l.b16 %v85
    %v163 = vunpack.c.h.b16 %v85
    %v164 = vunpack.c.l.b16 %v86
    %v165 = vunpack.c.h.b16 %v86
    %v166 = vunpack.c.l.b16 %v87
    %v167 = vunpack.c.h.b16 %v87
    %v168 = vunpack.c.l.b16 %v88
    %v169 = vunpack.c.h.b16 %v88
    %v170 = vunpack.c.l.b16 %v89
    %v171 = vunpack.c.h.b16 %v89
    %v172 = vunpack.c.l.b16 %v90
    %v173 = vunpack.c.h.b16 %v90
    %v174 = vunpack.c.l.b16 %v91
    %v175 = vunpack.c.h.b16 %v91
    %v176 = vunpack.c.l.b16 %v92
    %v177 = vunpack.c.h.b16 %v92
    %v178 = vunpack.c.l.b16 %v93
    %v179 = vunpack.c.h.b16 %v93
    %v180 = vunpack.c.l.b16 %v94
    %v181 = vunpack.c.h.b16 %v94
    %v182 = vunpack.c.l.b16 %v95
    %v183 = vunpack.c.h.b16 %v95
    %v184 = vpack.c.b16 %v154, %v152
    %v185 = vpack.c.b16 %v155, %v153
    %v186 = vpack.c.b16 %v158, %v156
    %v187 = vpack.c.b16 %v159, %v157
    %v188 = vpack.c.b16 %v162, %v160
    %v189 = vpack.c.b16 %v163, %v161
    %v190 = vpack.c.b16 %v166, %v164
    %v191 = vpack.c.b16 %v167, %v165
    %v192 = vpack.c.b16 %v170, %v168
    %v193 = vpack.c.b16 %v171, %v169
    %v194 = vpack.c.b16 %v174, %v172
    %v195 = vpack.c.b16 %v175, %v173
    %v196 = vpack.c.b16 %v178, %v176
    %v197 = vpack.c.b16 %v179, %v177
    %v198 = vpack.c.b16 %v182, %v180
    %v199 = vpack.c.b16 %v183, %v181
    %v248 = vunpack.c.l.b16 %v96
    %v249 = vunpack.c.h.b16 %v96
    %v250 = vunpack.c.l.b16 %v97
    %v251 = vunpack.c.l.b16 %v98
    %v252 = vunpack.c.h.b16 %v98
    %v253 = vunpack.c.l.b16 %v99
    %v254 = vunpack.c.l.b16 %v100
    %v255 = vunpack.c.h.b16 %v100
    %v256 = vunpack.c.l.b16 %v101
    %v257 = vunpack.c.l.b16 %v102
    %v258 = vunpack.c.h.b16 %v102
    %v259 = vunpack.c.l.b16 %v103
    %v260 = vunpack.c.l.b16 %v104
    %v261 = vunpack.c.h.b16 %v104
    %v262 = vunpack.c.l.b16 %v105
    %v263 = vunpack.c.l.b16 %v106
    %v264 = vunpack.c.h.b16 %v106
    %v265 = vunpack.c.l.b16 %v107
    %v266 = vunpack.c.l.b16 %v108
    %v267 = vunpack.c.h.b16 %v108
    %v268 = vunpack.c.l.b16 %v109
    %v269 = vunpack.c.l.b16 %v110
    %v270 = vunpack.c.h.b16 %v110
    %v271 = vunpack.c.l.b16 %v111
    %v272 = vunpack.c.l.b16 %v112
    %v273 = vunpack.c.h.b16 %v112
    %v274 = vunpack.c.l.b16 %v113
    %v275 = vunpack.c.l.b16 %v114
    %v276 = vunpack.c.h.b16 %v114
    %v277 = vunpack.c.l.b16 %v115
    %v278 = vunpack.c.l.b16 %v116
    %v279 = vunpack.c.h.b16 %v116
    %v280 = vunpack.c.l.b16 %v117
    %v281 = vunpack.c.l.b16 %v118
    %v282 = vunpack.c.h.b16 %v118
    %v283 = vunpack.c.l.b16 %v119
    %v284 = vunpack.c.l.b16 %v120
    %v285 = vunpack.c.h.b16 %v120
    %v286 = vunpack.c.l.b16 %v121
    %v287 = vunpack.c.l.b16 %v122
    %v288 = vunpack.c.h.b16 %v122
    %v289 = vunpack.c.l.b16 %v123
    %v290 = vunpack.c.l.b16 %v124
    %v291 = vunpack.c.h.b16 %v124
    %v292 = vunpack.c.l.b16 %v125
    %v293 = vunpack.c.l.b16 %v126
    %v294 = vunpack.c.h.b16 %v126
    %v295 = vunpack.c.l.b16 %v127
    %v296 = vunpack.c.l.b16 %v128
    %v297 = vunpack.c.h.b16 %v128
    %v298 = vunpack.c.l.b16 %v129
    %v299 = vunpack.c.l.b16 %v130
    %v300 = vunpack.c.h.b16 %v130
    %v301 = vunpack.c.l.b16 %v131
    %v302 = vunpack.c.l.b16 %v132
    %v303 = vunpack.c.h.b16 %v132
    %v304 = vunpack.c.l.b16 %v133
    %v305 = vunpack.c.l.b16 %v134
    %v306 = vunpack.c.h.b16 %v134
    %v307 = vunpack.c.l.b16 %v135
    %v308 = vpack.c.b16 %v251, %v248
    %v309 = vpack.c.b16 %v252, %v249
    %v310 = vpack.c.b16 %v253, %v250
    %v311 = vpack.c.b16 %v257, %v254
    %v312 = vpack.c.b16 %v258, %v255
    %v313 = vpack.c.b16 %v259, %v256
    %v314 = vpack.c.b16 %v263, %v260
    %v315 = vpack.c.b16 %v264, %v261
    %v316 = vpack.c.b16 %v265, %v262
    %v317 = vpack.c.b16 %v269, %v266
    %v318 = vpack.c.b16 %v270, %v267
    %v319 = vpack.c.b16 %v271, %v268
    %v320 = vpack.c.b16 %v275, %v272
    %v321 = vpack.c.b16 %v276, %v273
    %v322 = vpack.c.b16 %v277, %v274
    %v323 = vpack.c.b16 %v281, %v278
    %v324 = vpack.c.b16 %v282, %v279
    %v325 = vpack.c.b16 %v283, %v280
    %v326 = vpack.c.b16 %v287, %v284
    %v327 = vpack.c.b16 %v288, %v285
    %v328 = vpack.c.b16 %v289, %v286
    %v329 = vpack.c.b16 %v293, %v290
    %v330 = vpack.c.b16 %v294, %v291
    %v331 = vpack.c.b16 %v295, %v292
    %v332 = vpack.c.b16 %v299, %v296
    %v333 = vpack.c.b16 %v300, %v297
    %v334 = vpack.c.b16 %v301, %v298
    %v335 = vpack.c.b16 %v305, %v302
    %v336 = vpack.c.b16 %v306, %v303
    %v337 = vpack.c.b16 %v307, %v304
    %vm368 = vcmask 261120
    %v370 = vsel %vm368, %v185, 0
    %v373 = vsel %vm368, %v187, 0
    %v376 = vsel %vm368, %v189, 0
    %v379 = vsel %vm368, %v191, 0
    %v382 = vsel %vm368, %v193, 0
    %v385 = vsel %vm368, %v195, 0
    %v388 = vsel %vm368, %v197, 0
    %v391 = vsel %vm368, %v199, 0
    %393 = vmatprep.subr.bf16.mxu0 %v309
    %394 = vmatpush1.bf16.msra.mxu0 %v308
    %395 = vmatprep.subr.bf16.mxu0 %v312
    %396 = vmatpush1.bf16.msra.mxu0 %v311
    %397 = vmatprep.subr.bf16.mxu0 %v315
    %398 = vmatpush1.bf16.msra.mxu0 %v314
    %399 = vmatprep.subr.bf16.mxu0 %v318
    %400 = vmatpush1.bf16.msra.mxu0 %v317
    %401 = vmatprep.subr.bf16.mxu0 %v321
    %402 = vmatpush1.bf16.msra.mxu0 %v320
    %403 = vmatprep.subr.bf16.mxu0 %v324
    %404 = vmatpush1.bf16.msra.mxu0 %v323
    %405 = vmatprep.subr.bf16.mxu0 %v327
    %406 = vmatpush1.bf16.msra.mxu0 %v326
    %407 = vmatprep.subr.bf16.mxu0 %v330
    %408 = vmatpush1.bf16.msra.mxu0 %v329
    %409 = vmatprep.subr.bf16.mxu0 %v333
    %410 = vmatpush1.bf16.msra.mxu0 %v332
    %411 = vmatprep.subr.bf16.mxu0 %v336
    %412 = vmatpush1.bf16.msra.mxu0 %v335
    %413 = vmatprep.subr.bf16.mxu0 0
    %414 = vmatpush1.bf16.msra.mxu0 0
    %415 = vmatprep.subr.bf16.mxu0 0
    %416 = vmatpush1.bf16.msra.mxu0 0
    %417 = vmatprep.subr.bf16.mxu0 0
    %418 = vmatpush1.bf16.msra.mxu0 0
    %419 = vmatprep.subr.bf16.mxu0 0
    %420 = vmatpush1.bf16.msra.mxu0 0
    %421 = vmatprep.subr.bf16.mxu0 0
    %422 = vmatpush1.bf16.msra.mxu0 0
    %423 = vmatprep.subr.bf16.mxu0 0
    %424 = vmatpush1.bf16.msra.mxu0 0
    %425 = vmatprep.mubr.bf16.mxu0 %v370
    %426 = vmatmul.mubr.bf16.gmra.mrb[0].mxu0 %v184
    %v427 = vpop.f32.mrb[0].mxu0
    %v428 = vadd.f32 0.0, %v427
    %v429 = vpop.f32.mrb[0].mxu0
    %v430 = vadd.f32 0.0, %v429
    %v431 = vpop.f32.mrb[0].mxu0
    %v432 = vadd.f32 0.0, %v431
    %v433 = vpop.f32.mrb[0].mxu0
    %v434 = vadd.f32 0.0, %v433
    %435 = vmatprep.mubr.bf16.mxu0 %v373
    %436 = vmatmul.mubr.bf16.gmra.mrb[0].mxu0 %v186
    %v437 = vpop.f32.mrb[0].mxu0
    %v438 = vadd.f32 0.0, %v437
    %v439 = vpop.f32.mrb[0].mxu0
    %v440 = vadd.f32 0.0, %v439
    %v441 = vpop.f32.mrb[0].mxu0
    %v442 = vadd.f32 0.0, %v441
    %v443 = vpop.f32.mrb[0].mxu0
    %v444 = vadd.f32 0.0, %v443
    %445 = vmatprep.mubr.bf16.mxu0 %v376
    %446 = vmatmul.mubr.bf16.gmra.mrb[0].mxu0 %v188
    %v447 = vpop.f32.mrb[0].mxu0
    %v448 = vadd.f32 0.0, %v447
    %v449 = vpop.f32.mrb[0].mxu0
    %v450 = vadd.f32 0.0, %v449
    %v451 = vpop.f32.mrb[0].mxu0
    %v452 = vadd.f32 0.0, %v451
    %v453 = vpop.f32.mrb[0].mxu0
    %v454 = vadd.f32 0.0, %v453
    %455 = vmatprep.mubr.bf16.mxu0 %v379
    %456 = vmatmul.mubr.bf16.gmra.mrb[0].mxu0 %v190
    %v457 = vpop.f32.mrb[0].mxu0
    %v458 = vadd.f32 0.0, %v457
    %v459 = vpop.f32.mrb[0].mxu0
    %v460 = vadd.f32 0.0, %v459
    %v461 = vpop.f32.mrb[0].mxu0
    %v462 = vadd.f32 0.0, %v461
    %v463 = vpop.f32.mrb[0].mxu0
    %v464 = vadd.f32 0.0, %v463
    %465 = vmatprep.mubr.bf16.mxu0 %v382
    %466 = vmatmul.mubr.bf16.gmra.mrb[0].mxu0 %v192
    %v467 = vpop.f32.mrb[0].mxu0
    %v468 = vadd.f32 0.0, %v467
    %v469 = vpop.f32.mrb[0].mxu0
    %v470 = vadd.f32 0.0, %v469
    %v471 = vpop.f32.mrb[0].mxu0
    %v472 = vadd.f32 0.0, %v471
    %v473 = vpop.f32.mrb[0].mxu0
    %v474 = vadd.f32 0.0, %v473
    %475 = vmatprep.mubr.bf16.mxu0 %v385
    %476 = vmatmul.mubr.bf16.gmra.mrb[0].mxu0 %v194
    %v477 = vpop.f32.mrb[0].mxu0
    %v478 = vadd.f32 0.0, %v477
    %v479 = vpop.f32.mrb[0].mxu0
    %v480 = vadd.f32 0.0, %v479
    %v481 = vpop.f32.mrb[0].mxu0
    %v482 = vadd.f32 0.0, %v481
    %v483 = vpop.f32.mrb[0].mxu0
    %v484 = vadd.f32 0.0, %v483
    %485 = vmatprep.mubr.bf16.mxu0 %v388
    %486 = vmatmul.mubr.bf16.gmra.mrb[0].mxu0 %v196
    %v487 = vpop.f32.mrb[0].mxu0
    %v488 = vadd.f32 0.0, %v487
    %v489 = vpop.f32.mrb[0].mxu0
    %v490 = vadd.f32 0.0, %v489
    %v491 = vpop.f32.mrb[0].mxu0
    %v492 = vadd.f32 0.0, %v491
    %v493 = vpop.f32.mrb[0].mxu0
    %v494 = vadd.f32 0.0, %v493
    %495 = vmatprep.mubr.bf16.mxu0 %v391
    %496 = vmatmul.mubr.bf16.gmra.mrb[0].mxu0 %v198
    %v497 = vpop.f32.mrb[0].mxu0
    %v498 = vadd.f32 0.0, %v497
    %v499 = vpop.f32.mrb[0].mxu0
    %v500 = vadd.f32 0.0, %v499
    %v501 = vpop.f32.mrb[0].mxu0
    %v502 = vadd.f32 0.0, %v501
    %v503 = vpop.f32.mrb[0].mxu0
    %v504 = vadd.f32 0.0, %v503
    %505 = vdwg.mxu0
    %506 = vmatprep.subr.bf16.mxu0 0
    %507 = vmatpush1.bf16.msra.mxu0 %v310
    %508 = vmatprep.subr.bf16.mxu0 0
    %509 = vmatpush1.bf16.msra.mxu0 %v313
    %510 = vmatprep.subr.bf16.mxu0 0
    %511 = vmatpush1.bf16.msra.mxu0 %v316
    %512 = vmatprep.subr.bf16.mxu0 0
    %513 = vmatpush1.bf16.msra.mxu0 %v319
    %514 = vmatprep.subr.bf16.mxu0 0
    %515 = vmatpush1.bf16.msra.mxu0 %v322
    %516 = vmatprep.subr.bf16.mxu0 0
    %517 = vmatpush1.bf16.msra.mxu0 %v325
    %518 = vmatprep.subr.bf16.mxu0 0
    %519 = vmatpush1.bf16.msra.mxu0 %v328
    %520 = vmatprep.subr.bf16.mxu0 0
    %521 = vmatpush1.bf16.msra.mxu0 %v331
    %522 = vmatprep.subr.bf16.mxu0 0
    %523 = vmatpush1.bf16.msra.mxu0 %v334
    %524 = vmatprep.subr.bf16.mxu0 0
    %525 = vmatpush1.bf16.msra.mxu0 %v337
    %526 = vmatprep.subr.bf16.mxu0 0
    %527 = vmatpush1.bf16.msra.mxu0 0
    %528 = vmatprep.subr.bf16.mxu0 0
    %529 = vmatpush1.bf16.msra.mxu0 0
    %530 = vmatprep.subr.bf16.mxu0 0
    %531 = vmatpush1.bf16.msra.mxu0 0
    %532 = vmatprep.subr.bf16.mxu0 0
    %533 = vmatpush1.bf16.msra.mxu0 0
    %534 = vmatprep.subr.bf16.mxu0 0
    %535 = vmatpush1.bf16.msra.mxu0 0
    %536 = vmatprep.subr.bf16.mxu0 0
    %537 = vmatpush1.bf16.msra.mxu0 0
    %538 = vmatprep.mubr.bf16.mxu0 %v370
    %539 = vmatmul.mubr.bf16.gmra.mrb[0].mxu0 %v184
    %v540 = vpop.f32.mrb[0].mxu0
    %v541 = vadd.f32 0.0, %v540
    %v542 = vpop.f32.mrb[0].mxu0
    %v543 = vpop.f32.mrb[0].mxu0
    %v544 = vadd.f32 0.0, %v543
    %v545 = vpop.f32.mrb[0].mxu0
    %546 = vmatprep.mubr.bf16.mxu0 %v373
    %547 = vmatmul.mubr.bf16.gmra.mrb[0].mxu0 %v186
    %v548 = vpop.f32.mrb[0].mxu0
    %v549 = vadd.f32 0.0, %v548
    %v550 = vpop.f32.mrb[0].mxu0
    %v551 = vpop.f32.mrb[0].mxu0
    %v552 = vadd.f32 0.0, %v551
    %v553 = vpop.f32.mrb[0].mxu0
    %554 = vmatprep.mubr.bf16.mxu0 %v376
    %555 = vmatmul.mubr.bf16.gmra.mrb[0].mxu0 %v188
    %v556 = vpop.f32.mrb[0].mxu0
    %v557 = vadd.f32 0.0, %v556
    %v558 = vpop.f32.mrb[0].mxu0
    %v559 = vpop.f32.mrb[0].mxu0
    %v560 = vadd.f32 0.0, %v559
    %v561 = vpop.f32.mrb[0].mxu0
    %562 = vmatprep.mubr.bf16.mxu0 %v379
    %563 = vmatmul.mubr.bf16.gmra.mrb[0].mxu0 %v190
    %v564 = vpop.f32.mrb[0].mxu0
    %v565 = vadd.f32 0.0, %v564
    %v566 = vpop.f32.mrb[0].mxu0
    %v567 = vpop.f32.mrb[0].mxu0
    %v568 = vadd.f32 0.0, %v567
    %v569 = vpop.f32.mrb[0].mxu0
    %570 = vmatprep.mubr.bf16.mxu0 %v382
    %571 = vmatmul.mubr.bf16.gmra.mrb[0].mxu0 %v192
    %v572 = vpop.f32.mrb[0].mxu0
    %v573 = vadd.f32 0.0, %v572
    %v574 = vpop.f32.mrb[0].mxu0
    %v575 = vpop.f32.mrb[0].mxu0
    %v576 = vadd.f32 0.0, %v575
    %v577 = vpop.f32.mrb[0].mxu0
    %578 = vmatprep.mubr.bf16.mxu0 %v385
    %579 = vmatmul.mubr.bf16.gmra.mrb[0].mxu0 %v194
    %v580 = vpop.f32.mrb[0].mxu0
    %v581 = vadd.f32 0.0, %v580
    %v582 = vpop.f32.mrb[0].mxu0
    %v583 = vpop.f32.mrb[0].mxu0
    %v584 = vadd.f32 0.0, %v583
    %v585 = vpop.f32.mrb[0].mxu0
    %586 = vmatprep.mubr.bf16.mxu0 %v388
    %587 = vmatmul.mubr.bf16.gmra.mrb[0].mxu0 %v196
    %v588 = vpop.f32.mrb[0].mxu0
    %v589 = vadd.f32 0.0, %v588
    %v590 = vpop.f32.mrb[0].mxu0
    %v591 = vpop.f32.mrb[0].mxu0
    %v592 = vadd.f32 0.0, %v591
    %v593 = vpop.f32.mrb[0].mxu0
    %594 = vmatprep.mubr.bf16.mxu0 %v391
    %595 = vmatmul.mubr.bf16.gmra.mrb[0].mxu0 %v198
    %v596 = vpop.f32.mrb[0].mxu0
    %v597 = vadd.f32 0.0, %v596
    %v598 = vpop.f32.mrb[0].mxu0
    %v599 = vpop.f32.mrb[0].mxu0
    %v600 = vadd.f32 0.0, %v599
    %v601 = vpop.f32.mrb[0].mxu0
    %602 = vdwg.mxu0
    %v603 = vld [vmem:[#allocation7] sm:$0xff]
    %v604 = vld [vmem:[#allocation7 + $0x8] sm:$0xff]
    %v605 = vld [vmem:[#allocation7 + $0x10] sm:$0xff]
    %v606 = vld [vmem:[#allocation7 + $0x18] sm:$0xff]
    %v607 = vld [vmem:[#allocation7 + $0x20] sm:$0xff]
    %v608 = vld [vmem:[#allocation7 + $0x28] sm:$0xff]
    %v609 = vadd.f32 %v428, %v603
    %v610 = vadd.f32 %v430, %v604
    %v611 = vadd.f32 %v541, %v605
    %v612 = vadd.f32 %v432, %v606
    %v613 = vadd.f32 %v434, %v607
    %v614 = vadd.f32 %v544, %v608
    %v615 = vadd.f32 %v438, %v603
    %v616 = vadd.f32 %v440, %v604
    %v617 = vadd.f32 %v549, %v605
    %v618 = vadd.f32 %v442, %v606
    %v619 = vadd.f32 %v444, %v607
    %v620 = vadd.f32 %v552, %v608
    %v621 = vadd.f32 %v448, %v603
    %v622 = vadd.f32 %v450, %v604
    %v623 = vadd.f32 %v557, %v605
    %v624 = vadd.f32 %v452, %v606
    %v625 = vadd.f32 %v454, %v607
    %v626 = vadd.f32 %v560, %v608
    %v627 = vadd.f32 %v458, %v603
    %v628 = vadd.f32 %v460, %v604
    %v629 = vadd.f32 %v565, %v605
    %v630 = vadd.f32 %v462, %v606
    %v631 = vadd.f32 %v464, %v607
    %v632 = vadd.f32 %v568, %v608
    %v633 = vadd.f32 %v468, %v603
    %v634 = vadd.f32 %v470, %v604
    %v635 = vadd.f32 %v573, %v605
    %v636 = vadd.f32 %v472, %v606
    %v637 = vadd.f32 %v474, %v607
    %v638 = vadd.f32 %v576, %v608
    %v639 = vadd.f32 %v478, %v603
    %v640 = vadd.f32 %v480, %v604
    %v641 = vadd.f32 %v581, %v605
    %v642 = vadd.f32 %v482, %v606
    %v643 = vadd.f32 %v484, %v607
    %v644 = vadd.f32 %v584, %v608
    %v645 = vadd.f32 %v488, %v603
    %v646 = vadd.f32 %v490, %v604
    %v647 = vadd.f32 %v589, %v605
    %v648 = vadd.f32 %v492, %v606
    %v649 = vadd.f32 %v494, %v607
    %v650 = vadd.f32 %v592, %v608
    %v651 = vadd.f32 %v498, %v603
    %v652 = vadd.f32 %v500, %v604
    %v653 = vadd.f32 %v597, %v605
    %v654 = vadd.f32 %v502, %v606
    %v655 = vadd.f32 %v504, %v607
    %v656 = vadd.f32 %v600, %v608
    %v657 = vmax.f32 %v609, %v612
    %v658 = vrot.slane %v657, 4
    %v659 = vmax.f32 %v657, %v658
    %v660 = vrot.slane %v659, 2
    %v661 = vmax.f32 %v659, %v660
    %v662 = vrot.slane %v661, 1
    %v663 = vmax.f32 %v661, %v662
    %v664 = vmax.f32 %v610, %v613
    %v665 = vrot.slane %v664, 4
    %v666 = vmax.f32 %v664, %v665
    %v667 = vrot.slane %v666, 2
    %v668 = vmax.f32 %v666, %v667
    %v669 = vrot.slane %v668, 1
    %v670 = vmax.f32 %v668, %v669
    %v671 = vmax.f32 %v611, %v614
    %v672 = vrot.slane %v671, 4
    %v673 = vmax.f32 %v671, %v672
    %v674 = vrot.slane %v673, 2
    %v675 = vmax.f32 %v673, %v674
    %v676 = vrot.slane %v675, 1
    %v677 = vmax.f32 %v675, %v676
    %v678 = vmax.f32 %v615, %v618
    %v679 = vrot.slane %v678, 4
    %v680 = vmax.f32 %v678, %v679
    %v681 = vrot.slane %v680, 2
    %v682 = vmax.f32 %v680, %v681
    %v683 = vrot.slane %v682, 1
    %v684 = vmax.f32 %v682, %v683
    %v685 = vmax.f32 %v616, %v619
    %v686 = vrot.slane %v685, 4
    %v687 = vmax.f32 %v685, %v686
    %v688 = vrot.slane %v687, 2
    %v689 = vmax.f32 %v687, %v688
    %v690 = vrot.slane %v689, 1
    %v691 = vmax.f32 %v689, %v690
    %v692 = vmax.f32 %v617, %v620
    %v693 = vrot.slane %v692, 4
    %v694 = vmax.f32 %v692, %v693
    %v695 = vrot.slane %v694, 2
    %v696 = vmax.f32 %v694, %v695
    %v697 = vrot.slane %v696, 1
    %v698 = vmax.f32 %v696, %v697
    %v699 = vmax.f32 %v621, %v624
    %v700 = vrot.slane %v699, 4
    %v701 = vmax.f32 %v699, %v700
    %v702 = vrot.slane %v701, 2
    %v703 = vmax.f32 %v701, %v702
    %v704 = vrot.slane %v703, 1
    %v705 = vmax.f32 %v703, %v704
    %v706 = vmax.f32 %v622, %v625
    %v707 = vrot.slane %v706, 4
    %v708 = vmax.f32 %v706, %v707
    %v709 = vrot.slane %v708, 2
    %v710 = vmax.f32 %v708, %v709
    %v711 = vrot.slane %v710, 1
    %v712 = vmax.f32 %v710, %v711
    %v713 = vmax.f32 %v623, %v626
    %v714 = vrot.slane %v713, 4
    %v715 = vmax.f32 %v713, %v714
    %v716 = vrot.slane %v715, 2
    %v717 = vmax.f32 %v715, %v716
    %v718 = vrot.slane %v717, 1
    %v719 = vmax.f32 %v717, %v718
    %v720 = vmax.f32 %v627, %v630
    %v721 = vrot.slane %v720, 4
    %v722 = vmax.f32 %v720, %v721
    %v723 = vrot.slane %v722, 2
    %v724 = vmax.f32 %v722, %v723
    %v725 = vrot.slane %v724, 1
    %v726 = vmax.f32 %v724, %v725
    %v727 = vmax.f32 %v628, %v631
    %v728 = vrot.slane %v727, 4
    %v729 = vmax.f32 %v727, %v728
    %v730 = vrot.slane %v729, 2
    %v731 = vmax.f32 %v729, %v730
    %v732 = vrot.slane %v731, 1
    %v733 = vmax.f32 %v731, %v732
    %v734 = vmax.f32 %v629, %v632
    %v735 = vrot.slane %v734, 4
    %v736 = vmax.f32 %v734, %v735
    %v737 = vrot.slane %v736, 2
    %v738 = vmax.f32 %v736, %v737
    %v739 = vrot.slane %v738, 1
    %v740 = vmax.f32 %v738, %v739
    %v741 = vmax.f32 %v633, %v636
    %v742 = vrot.slane %v741, 4
    %v743 = vmax.f32 %v741, %v742
    %v744 = vrot.slane %v743, 2
    %v745 = vmax.f32 %v743, %v744
    %v746 = vrot.slane %v745, 1
    %v747 = vmax.f32 %v745, %v746
    %v748 = vmax.f32 %v634, %v637
    %v749 = vrot.slane %v748, 4
    %v750 = vmax.f32 %v748, %v749
    %v751 = vrot.slane %v750, 2
    %v752 = vmax.f32 %v750, %v751
    %v753 = vrot.slane %v752, 1
    %v754 = vmax.f32 %v752, %v753
    %v755 = vmax.f32 %v635, %v638
    %v756 = vrot.slane %v755, 4
    %v757 = vmax.f32 %v755, %v756
    %v758 = vrot.slane %v757, 2
    %v759 = vmax.f32 %v757, %v758
    %v760 = vrot.slane %v759, 1
    %v761 = vmax.f32 %v759, %v760
    %v762 = vmax.f32 %v639, %v642
    %v763 = vrot.slane %v762, 4
    %v764 = vmax.f32 %v762, %v763
    %v765 = vrot.slane %v764, 2
    %v766 = vmax.f32 %v764, %v765
    %v767 = vrot.slane %v766, 1
    %v768 = vmax.f32 %v766, %v767
    %v769 = vmax.f32 %v640, %v643
    %v770 = vrot.slane %v769, 4
    %v771 = vmax.f32 %v769, %v770
    %v772 = vrot.slane %v771, 2
    %v773 = vmax.f32 %v771, %v772
    %v774 = vrot.slane %v773, 1
    %v775 = vmax.f32 %v773, %v774
    %v776 = vmax.f32 %v641, %v644
    %v777 = vrot.slane %v776, 4
    %v778 = vmax.f32 %v776, %v777
    %v779 = vrot.slane %v778, 2
    %v780 = vmax.f32 %v778, %v779
    %v781 = vrot.slane %v780, 1
    %v782 = vmax.f32 %v780, %v781
    %v783 = vmax.f32 %v645, %v648
    %v784 = vrot.slane %v783, 4
    %v785 = vmax.f32 %v783, %v784
    %v786 = vrot.slane %v785, 2
    %v787 = vmax.f32 %v785, %v786
    %v788 = vrot.slane %v787, 1
    %v789 = vmax.f32 %v787, %v788
    %v790 = vmax.f32 %v646, %v649
    %v791 = vrot.slane %v790, 4
    %v792 = vmax.f32 %v790, %v791
    %v793 = vrot.slane %v792, 2
    %v794 = vmax.f32 %v792, %v793
    %v795 = vrot.slane %v794, 1
    %v796 = vmax.f32 %v794, %v795
    %v797 = vmax.f32 %v647, %v650
    %v798 = vrot.slane %v797, 4
    %v799 = vmax.f32 %v797, %v798
    %v800 = vrot.slane %v799, 2
    %v801 = vmax.f32 %v799, %v800
    %v802 = vrot.slane %v801, 1
    %v803 = vmax.f32 %v801, %v802
    %v804 = vmax.f32 %v651, %v654
    %v805 = vrot.slane %v804, 4
    %v806 = vmax.f32 %v804, %v805
    %v807 = vrot.slane %v806, 2
    %v808 = vmax.f32 %v806, %v807
    %v809 = vrot.slane %v808, 1
    %v810 = vmax.f32 %v808, %v809
    %v811 = vmax.f32 %v652, %v655
    %v812 = vrot.slane %v811, 4
    %v813 = vmax.f32 %v811, %v812
    %v814 = vrot.slane %v813, 2
    %v815 = vmax.f32 %v813, %v814
    %v816 = vrot.slane %v815, 1
    %v817 = vmax.f32 %v815, %v816
    %v818 = vmax.f32 %v653, %v656
    %v819 = vrot.slane %v818, 4
    %v820 = vmax.f32 %v818, %v819
    %v821 = vrot.slane %v820, 2
    %v822 = vmax.f32 %v820, %v821
    %v823 = vrot.slane %v822, 1
    %v824 = vmax.f32 %v822, %v823
    %v825 = vld [vmem:[%s2] sm:$0x7]
    %v827 = vlaneseq
    %v828 = vshrl.u32 %v827, 7
    %v829 = vsub.s32 0, %v828
    %v830 = vrot.slane %v825, %v829
    %v831 = vlaneseq
    %v832 = vshrl.u32 %v831, 7
    %v833 = vsub.s32 1, %v832
    %v834 = vrot.slane %v825, %v833
    %v835 = vlaneseq
    %v836 = vshrl.u32 %v835, 7
    %v837 = vsub.s32 2, %v836
    %v838 = vrot.slane %v825, %v837
    %v842 = vadd.f32 %v663, %v830
    %v843 = vadd.f32 %v670, %v834
    %v844 = vadd.f32 %v677, %v838
    %v845 = vadd.f32 %v684, %v830
    %v846 = vadd.f32 %v691, %v834
    %v847 = vadd.f32 %v698, %v838
    %v848 = vadd.f32 %v705, %v830
    %v849 = vadd.f32 %v712, %v834
    %v850 = vadd.f32 %v719, %v838
    %v851 = vadd.f32 %v726, %v830
    %v852 = vadd.f32 %v733, %v834
    %v853 = vadd.f32 %v740, %v838
    %v854 = vadd.f32 %v747, %v830
    %v855 = vadd.f32 %v754, %v834
    %v856 = vadd.f32 %v761, %v838
    %v857 = vadd.f32 %v768, %v830
    %v858 = vadd.f32 %v775, %v834
    %v859 = vadd.f32 %v782, %v838
    %v860 = vadd.f32 %v789, %v830
    %v861 = vadd.f32 %v796, %v834
    %v862 = vadd.f32 %v803, %v838
    %v863 = vadd.f32 %v810, %v830
    %v864 = vadd.f32 %v817, %v834
    %v865 = vadd.f32 %v824, %v838
    %v866 = vmax.f32 %v842, 0.0
    %v867 = vmax.f32 %v843, 0.0
    %v868 = vmax.f32 %v844, 0.0
    %v869 = vmax.f32 %v845, 0.0
    %v870 = vmax.f32 %v846, 0.0
    %v871 = vmax.f32 %v847, 0.0
    %v872 = vmax.f32 %v848, 0.0
    %v873 = vmax.f32 %v849, 0.0
    %v874 = vmax.f32 %v850, 0.0
    %v875 = vmax.f32 %v851, 0.0
    %v876 = vmax.f32 %v852, 0.0
    %v877 = vmax.f32 %v853, 0.0
    %v878 = vmax.f32 %v854, 0.0
    %v879 = vmax.f32 %v855, 0.0
    %v880 = vmax.f32 %v856, 0.0
    %v881 = vmax.f32 %v857, 0.0
    %v882 = vmax.f32 %v858, 0.0
    %v883 = vmax.f32 %v859, 0.0
    %v884 = vmax.f32 %v860, 0.0
    %v885 = vmax.f32 %v861, 0.0
    %v886 = vmax.f32 %v862, 0.0
    %v887 = vmax.f32 %v863, 0.0
    %v888 = vmax.f32 %v864, 0.0
    %v889 = vmax.f32 %v865, 0.0
    %v890 = vpack.c.bf16 %v866, %v866
    %v891 = vpack.c.bf16 %v867, %v867
    %v892 = vpack.c.bf16 %v868, %v868
    %v893 = vpack.c.bf16 %v869, %v869
    %v894 = vpack.c.bf16 %v870, %v870
    %v895 = vpack.c.bf16 %v871, %v871
    %v896 = vpack.c.bf16 %v872, %v872
    %v897 = vpack.c.bf16 %v873, %v873
    %v898 = vpack.c.bf16 %v874, %v874
    %v899 = vpack.c.bf16 %v875, %v875
    %v900 = vpack.c.bf16 %v876, %v876
    %v901 = vpack.c.bf16 %v877, %v877
    %v902 = vpack.c.bf16 %v878, %v878
    %v903 = vpack.c.bf16 %v879, %v879
    %v904 = vpack.c.bf16 %v880, %v880
    %v905 = vpack.c.bf16 %v881, %v881
    %v906 = vpack.c.bf16 %v882, %v882
    %v907 = vpack.c.bf16 %v883, %v883
    %v908 = vpack.c.bf16 %v884, %v884
    %v909 = vpack.c.bf16 %v885, %v885
    %v910 = vpack.c.bf16 %v886, %v886
    %v911 = vpack.c.bf16 %v887, %v887
    %v912 = vpack.c.bf16 %v888, %v888
    %v913 = vpack.c.bf16 %v889, %v889
    %v914 = vld [vmem:[#allocation8] sm:$0xf]
    %v915 = vld [vmem:[#allocation8 + $0x4] sm:$0xf]
    %v916 = vld [vmem:[#allocation8 + $0x8] sm:$0xf]
    %v917 = vld [vmem:[#allocation8 + $0xc] sm:$0xf]
    %v918 = vld [vmem:[#allocation8 + $0x10] sm:$0xf]
    %v919 = vld [vmem:[#allocation8 + $0x14] sm:$0xf]
    %v920 = vld [vmem:[#allocation8 + $0x18] sm:$0xf]
    %v921 = vld [vmem:[#allocation8 + $0x1c] sm:$0xf]
    %v922 = vld [vmem:[#allocation8 + $0x20] sm:$0xf]
    %v923 = vld [vmem:[#allocation8 + $0x24] sm:$0xf]
    %v924 = vld [vmem:[#allocation8 + $0x28] sm:$0xf]
    %v925 = vld [vmem:[#allocation8 + $0x2c] sm:$0xf]
    %v926 = vld [vmem:[#allocation8 + $0x30] sm:$0xf]
    %v927 = vld [vmem:[#allocation8 + $0x34] sm:$0xf]
    %v928 = vld [vmem:[#allocation8 + $0x38] sm:$0xf]
    %v929 = vld [vmem:[#allocation8 + $0x3c] sm:$0xf]
    %v930 = vld [vmem:[#allocation8 + $0x40] sm:$0xf]
    %v931 = vld [vmem:[#allocation8 + $0x44] sm:$0xf]
    %v932 = vld [vmem:[#allocation8 + $0x48] sm:$0xf]
    %v933 = vld [vmem:[#allocation8 + $0x4c] sm:$0xf]
    %v934 = vld [vmem:[#allocation8 + $0x50] sm:$0xf]
    %v935 = vld [vmem:[#allocation8 + $0x54] sm:$0xf]
    %v936 = vld [vmem:[#allocation8 + $0x58] sm:$0xf]
    %v937 = vld [vmem:[#allocation8 + $0x5c] sm:$0xf]
    %v938 = vld [vmem:[#allocation8 + $0x60] sm:$0xf]
    %v939 = vld [vmem:[#allocation8 + $0x64] sm:$0xf]
    %v940 = vld [vmem:[#allocation8 + $0x68] sm:$0xf]
    %v941 = vld [vmem:[#allocation8 + $0x6c] sm:$0xf]
    %v942 = vld [vmem:[#allocation8 + $0x70] sm:$0xf]
    %v943 = vld [vmem:[#allocation8 + $0x74] sm:$0xf]
    %v944 = vld [vmem:[#allocation8 + $0x78] sm:$0xf]
    %v945 = vld [vmem:[#allocation8 + $0x7c] sm:$0xf]
    %v946 = vld [vmem:[#allocation8 + $0x80] sm:$0xf]
    %v947 = vld [vmem:[#allocation8 + $0x84] sm:$0xf]
    %v948 = vld [vmem:[#allocation8 + $0x88] sm:$0xf]
    %v949 = vld [vmem:[#allocation8 + $0x8c] sm:$0xf]
    %v950 = vld [vmem:[#allocation8 + $0x90] sm:$0xf]
    %v951 = vld [vmem:[#allocation8 + $0x94] sm:$0xf]
    %v952 = vld [vmem:[#allocation8 + $0x98] sm:$0xf]
    %v953 = vld [vmem:[#allocation8 + $0x9c] sm:$0xf]
    %v954 = vld [vmem:[#allocation8 + $0xa0] sm:$0xf]
    %v955 = vld [vmem:[#allocation8 + $0xa4] sm:$0xf]
    %v956 = vld [vmem:[#allocation8 + $0xa8] sm:$0xf]
    %v957 = vld [vmem:[#allocation8 + $0xac] sm:$0xf]
    %v958 = vld [vmem:[#allocation8 + $0xb0] sm:$0xf]
    %v959 = vld [vmem:[#allocation8 + $0xb4] sm:$0xf]
    %v960 = vld [vmem:[#allocation8 + $0xb8] sm:$0xf]
    %v961 = vld [vmem:[#allocation8 + $0xbc] sm:$0xf]
    %v962 = vld [vmem:[%s5] sm:$0x1]
    %v964 = vlaneseq
    %v965 = vshrl.u32 %v964, 7
    %v966 = vsub.s32 0, %v965
    %v967 = vrot.slane %v962, %v966
    %v993 = vunpack.c.l.b16 %v890
    %v994 = vunpack.c.l.b16 %v891
    %v995 = vunpack.c.l.b16 %v892
    %v996 = vunpack.c.l.b16 %v893
    %v997 = vunpack.c.l.b16 %v894
    %v998 = vunpack.c.l.b16 %v895
    %v999 = vunpack.c.l.b16 %v896
    %v1000 = vunpack.c.l.b16 %v897
    %v1001 = vunpack.c.l.b16 %v898
    %v1002 = vunpack.c.l.b16 %v899
    %v1003 = vunpack.c.l.b16 %v900
    %v1004 = vunpack.c.l.b16 %v901
    %v1005 = vunpack.c.l.b16 %v902
    %v1006 = vunpack.c.l.b16 %v903
    %v1007 = vunpack.c.l.b16 %v904
    %v1008 = vunpack.c.l.b16 %v905
    %v1009 = vunpack.c.l.b16 %v906
    %v1010 = vunpack.c.l.b16 %v907
    %v1011 = vunpack.c.l.b16 %v908
    %v1012 = vunpack.c.l.b16 %v909
    %v1013 = vunpack.c.l.b16 %v910
    %v1014 = vunpack.c.l.b16 %v911
    %v1015 = vunpack.c.l.b16 %v912
    %v1016 = vunpack.c.l.b16 %v913
    %v1017 = vrot.slane %v996, 7
    %vm1018 = vcmask 1041409
    %v1019 = vsel %vm1018, %v1017, %v993
    %v1020 = vrot.slane %v999, 6
    %vm1021 = vcmask 1042434
    %v1022 = vsel %vm1021, %v1020, %v1019
    %v1023 = vrot.slane %v1002, 5
    %vm1024 = vcmask 1043459
    %v1025 = vsel %vm1024, %v1023, %v1022
    %v1026 = vrot.slane %v1005, 4
    %vm1027 = vcmask 1044484
    %v1028 = vsel %vm1027, %v1026, %v1025
    %v1029 = vrot.slane %v1008, 3
    %vm1030 = vcmask 1045509
    %v1031 = vsel %vm1030, %v1029, %v1028
    %v1032 = vrot.slane %v1011, 2
    %vm1033 = vcmask 1046534
    %v1034 = vsel %vm1033, %v1032, %v1031
    %v1035 = vrot.slane %v1014, 1
    %vm1036 = vcmask 1047559
    %v1037 = vsel %vm1036, %v1035, %v1034
    %v1038 = vrot.slane %v997, 7
    %v1039 = vsel %vm1018, %v1038, %v994
    %v1040 = vrot.slane %v1000, 6
    %v1041 = vsel %vm1021, %v1040, %v1039
    %v1042 = vrot.slane %v1003, 5
    %v1043 = vsel %vm1024, %v1042, %v1041
    %v1044 = vrot.slane %v1006, 4
    %v1045 = vsel %vm1027, %v1044, %v1043
    %v1046 = vrot.slane %v1009, 3
    %v1047 = vsel %vm1030, %v1046, %v1045
    %v1048 = vrot.slane %v1012, 2
    %v1049 = vsel %vm1033, %v1048, %v1047
    %v1050 = vrot.slane %v1015, 1
    %v1051 = vsel %vm1036, %v1050, %v1049
    %v1052 = vrot.slane %v998, 7
    %v1053 = vsel %vm1018, %v1052, %v995
    %v1054 = vrot.slane %v1001, 6
    %v1055 = vsel %vm1021, %v1054, %v1053
    %v1056 = vrot.slane %v1004, 5
    %v1057 = vsel %vm1024, %v1056, %v1055
    %v1058 = vrot.slane %v1007, 4
    %v1059 = vsel %vm1027, %v1058, %v1057
    %v1060 = vrot.slane %v1010, 3
    %v1061 = vsel %vm1030, %v1060, %v1059
    %v1062 = vrot.slane %v1013, 2
    %v1063 = vsel %vm1033, %v1062, %v1061
    %v1064 = vrot.slane %v1016, 1
    %v1065 = vsel %vm1036, %v1064, %v1063
    %v1066 = vpack.c.b16 %v1037, %v1037
    %v1067 = vpack.c.b16 %v1051, %v1051
    %v1068 = vpack.c.b16 %v1065, %v1065
    %v1120 = vunpack.c.l.b16 %v914
    %v1121 = vunpack.c.l.b16 %v915
    %v1122 = vunpack.c.l.b16 %v916
    %v1123 = vunpack.c.l.b16 %v917
    %v1124 = vunpack.c.l.b16 %v918
    %v1125 = vunpack.c.l.b16 %v919
    %v1126 = vunpack.c.l.b16 %v920
    %v1127 = vunpack.c.l.b16 %v921
    %v1128 = vunpack.c.l.b16 %v922
    %v1129 = vunpack.c.l.b16 %v923
    %v1130 = vunpack.c.l.b16 %v924
    %v1131 = vunpack.c.l.b16 %v925
    %v1132 = vunpack.c.l.b16 %v926
    %v1133 = vunpack.c.l.b16 %v927
    %v1134 = vunpack.c.l.b16 %v928
    %v1135 = vunpack.c.l.b16 %v929
    %v1136 = vunpack.c.l.b16 %v930
    %v1137 = vunpack.c.l.b16 %v931
    %v1138 = vunpack.c.l.b16 %v932
    %v1139 = vunpack.c.l.b16 %v933
    %v1140 = vunpack.c.l.b16 %v934
    %v1141 = vunpack.c.l.b16 %v935
    %v1142 = vunpack.c.l.b16 %v936
    %v1143 = vunpack.c.l.b16 %v937
    %v1144 = vunpack.c.l.b16 %v938
    %v1145 = vunpack.c.l.b16 %v939
    %v1146 = vunpack.c.l.b16 %v940
    %v1147 = vunpack.c.l.b16 %v941
    %v1148 = vunpack.c.l.b16 %v942
    %v1149 = vunpack.c.l.b16 %v943
    %v1150 = vunpack.c.l.b16 %v944
    %v1151 = vunpack.c.l.b16 %v945
    %v1152 = vunpack.c.l.b16 %v946
    %v1153 = vunpack.c.l.b16 %v947
    %v1154 = vunpack.c.l.b16 %v948
    %v1155 = vunpack.c.l.b16 %v949
    %v1156 = vunpack.c.l.b16 %v950
    %v1157 = vunpack.c.l.b16 %v951
    %v1158 = vunpack.c.l.b16 %v952
    %v1159 = vunpack.c.l.b16 %v953
    %v1160 = vunpack.c.l.b16 %v954
    %v1161 = vunpack.c.l.b16 %v955
    %v1162 = vunpack.c.l.b16 %v956
    %v1163 = vunpack.c.l.b16 %v957
    %v1164 = vunpack.c.l.b16 %v958
    %v1165 = vunpack.c.l.b16 %v959
    %v1166 = vunpack.c.l.b16 %v960
    %v1167 = vunpack.c.l.b16 %v961
    %v1168 = vpack.c.b16 %v1121, %v1120
    %v1169 = vpack.c.b16 %v1123, %v1122
    %v1170 = vpack.c.b16 %v1125, %v1124
    %v1171 = vpack.c.b16 %v1127, %v1126
    %v1172 = vpack.c.b16 %v1129, %v1128
    %v1173 = vpack.c.b16 %v1131, %v1130
    %v1174 = vpack.c.b16 %v1133, %v1132
    %v1175 = vpack.c.b16 %v1135, %v1134
    %v1176 = vpack.c.b16 %v1137, %v1136
    %v1177 = vpack.c.b16 %v1139, %v1138
    %v1178 = vpack.c.b16 %v1141, %v1140
    %v1179 = vpack.c.b16 %v1143, %v1142
    %v1180 = vpack.c.b16 %v1145, %v1144
    %v1181 = vpack.c.b16 %v1147, %v1146
    %v1182 = vpack.c.b16 %v1149, %v1148
    %v1183 = vpack.c.b16 %v1151, %v1150
    %v1184 = vpack.c.b16 %v1153, %v1152
    %v1185 = vpack.c.b16 %v1155, %v1154
    %v1186 = vpack.c.b16 %v1157, %v1156
    %v1187 = vpack.c.b16 %v1159, %v1158
    %v1188 = vpack.c.b16 %v1161, %v1160
    %v1189 = vpack.c.b16 %v1163, %v1162
    %v1190 = vpack.c.b16 %v1165, %v1164
    %v1191 = vpack.c.b16 %v1167, %v1166
    %1216 = vmatprep.subr.bf16.mxu0 0
    %1217 = vmatpush1.bf16.msra.mxu0 %v1168
    %1218 = vmatprep.subr.bf16.mxu0 0
    %1219 = vmatpush1.bf16.msra.mxu0 %v1169
    %1220 = vmatprep.subr.bf16.mxu0 0
    %1221 = vmatpush1.bf16.msra.mxu0 %v1170
    %1222 = vmatprep.subr.bf16.mxu0 0
    %1223 = vmatpush1.bf16.msra.mxu0 %v1171
    %1224 = vmatprep.subr.bf16.mxu0 0
    %1225 = vmatpush1.bf16.msra.mxu0 %v1172
    %1226 = vmatprep.subr.bf16.mxu0 0
    %1227 = vmatpush1.bf16.msra.mxu0 %v1173
    %1228 = vmatprep.subr.bf16.mxu0 0
    %1229 = vmatpush1.bf16.msra.mxu0 %v1174
    %1230 = vmatprep.subr.bf16.mxu0 0
    %1231 = vmatpush1.bf16.msra.mxu0 %v1175
    %1232 = vmatprep.subr.bf16.mxu0 0
    %1233 = vmatpush1.bf16.msra.mxu0 %v1176
    %1234 = vmatprep.subr.bf16.mxu0 0
    %1235 = vmatpush1.bf16.msra.mxu0 %v1177
    %1236 = vmatprep.subr.bf16.mxu0 0
    %1237 = vmatpush1.bf16.msra.mxu0 %v1178
    %1238 = vmatprep.subr.bf16.mxu0 0
    %1239 = vmatpush1.bf16.msra.mxu0 %v1179
    %1240 = vmatprep.subr.bf16.mxu0 0
    %1241 = vmatpush1.bf16.msra.mxu0 %v1180
    %1242 = vmatprep.subr.bf16.mxu0 0
    %1243 = vmatpush1.bf16.msra.mxu0 %v1181
    %1244 = vmatprep.subr.bf16.mxu0 0
    %1245 = vmatpush1.bf16.msra.mxu0 %v1182
    %1246 = vmatprep.subr.bf16.mxu0 0
    %1247 = vmatpush1.bf16.msra.mxu0 %v1183
    %1248 = vmatprep.mubr.bf16.mxu0 %v1067
    %1249 = vmatmul.mubr.bf16.gmra.mrb[0].mxu0 %v1066
    %v1250 = vpop.f32.mrb[0].mxu0
    %v1251 = vadd.f32 %v967, %v1250
    %v1252 = vpop.f32.mrb[0].mxu0
    %v1253 = vpop.f32.mrb[0].mxu0
    %v1254 = vpop.f32.mrb[0].mxu0
    %1255 = vdwg.mxu0
    %1256 = vmatprep.subr.bf16.mxu0 0
    %1257 = vmatpush1.bf16.msra.mxu0 %v1184
    %1258 = vmatprep.subr.bf16.mxu0 0
    %1259 = vmatpush1.bf16.msra.mxu0 %v1185
    %1260 = vmatprep.subr.bf16.mxu0 0
    %1261 = vmatpush1.bf16.msra.mxu0 %v1186
    %1262 = vmatprep.subr.bf16.mxu0 0
    %1263 = vmatpush1.bf16.msra.mxu0 %v1187
    %1264 = vmatprep.subr.bf16.mxu0 0
    %1265 = vmatpush1.bf16.msra.mxu0 %v1188
    %1266 = vmatprep.subr.bf16.mxu0 0
    %1267 = vmatpush1.bf16.msra.mxu0 %v1189
    %1268 = vmatprep.subr.bf16.mxu0 0
    %1269 = vmatpush1.bf16.msra.mxu0 %v1190
    %1270 = vmatprep.subr.bf16.mxu0 0
    %1271 = vmatpush1.bf16.msra.mxu0 %v1191
    %1272 = vmatprep.subr.bf16.mxu0 0
    %1273 = vmatpush1.bf16.msra.mxu0 0
    %1274 = vmatprep.subr.bf16.mxu0 0
    %1275 = vmatpush1.bf16.msra.mxu0 0
    %1276 = vmatprep.subr.bf16.mxu0 0
    %1277 = vmatpush1.bf16.msra.mxu0 0
    %1278 = vmatprep.subr.bf16.mxu0 0
    %1279 = vmatpush1.bf16.msra.mxu0 0
    %1280 = vmatprep.subr.bf16.mxu0 0
    %1281 = vmatpush1.bf16.msra.mxu0 0
    %1282 = vmatprep.subr.bf16.mxu0 0
    %1283 = vmatpush1.bf16.msra.mxu0 0
    %1284 = vmatprep.subr.bf16.mxu0 0
    %1285 = vmatpush1.bf16.msra.mxu0 0
    %1286 = vmatprep.subr.bf16.mxu0 0
    %1287 = vmatpush1.bf16.msra.mxu0 0
    %1288 = vmatprep.mubr.bf16.mxu0 0
    %1289 = vmatmul.mubr.bf16.gmra.mrb[0].mxu0 %v1068
    %v1290 = vpop.f32.mrb[0].mxu0
    %v1291 = vadd.f32 %v1251, %v1290
    %v1292 = vpop.f32.mrb[0].mxu0
    %v1293 = vpop.f32.mrb[0].mxu0
    %v1294 = vpop.f32.mrb[0].mxu0
    %1295 = vdwg.mxu0
    %1296 = vst [vmem:[#allocation10] sm:$0xff] %v1291
    // Predicated region
    $region42: #{tpu_custom_call.1} parent=1 // pred_check
      _
    $region43: #{tpu_custom_call.1} parent=1 // pred_check_branch
      %1298 = sbr.rel (0) target = $region45
    $region44: #{tpu_custom_call.1} parent=1 // pred_region
      %s1300 = ssub.s32 128, 128
      %1301 = vsyncadd [#allocation4], %s1300
      %s1303 = sshll.u32 [#allocation10], 4
      %s1304 = int_to_ptr.vmem [resolvable:$true] %s1303
      %1306 = dma.vmem_to_hbm [thread:$0]  %s1304, 128, %s6, [#allocation4]
    $region45: #{tpu_custom_call.1} parent=1 // pred_fallthru
      _
    // Predicated region
    $region46: #{tpu_custom_call.1} parent=1 // pred_check
      _
    $region47: #{tpu_custom_call.1} parent=1 // pred_check_branch
      %1308 = sbr.rel (0) target = $region49
    $region48: #{tpu_custom_call.1} parent=1 // pred_region
      %1309 = dma.done [#allocation4], 128
    $region49: #{tpu_custom_call.1} parent=1 // pred_fallthru
      _
    %1310 = vsyncpa [#allocation3], 1
    %1311 = vsyncpa [#allocation6], 1
    %1312 = vsyncpa [#allocation9], 1
    %1313 = vsyncpa [#allocation4], 1

</llo_original>
